<compile_context>
chip_gen: v7x
topology: tpu7x:2x2x1
jax: 0.10.0
libtpu: 0.0.40
codegen_flags: <defaults>
</compile_context>

<pallas_src>
import jax
import jax.numpy as jnp
from jax.experimental import pallas as pl
from jax.experimental.pallas import tpu as pltpu


# ---------------------------------------------------------------------------
# Fused kernel
# ---------------------------------------------------------------------------
def _make_fused_ae_kernel(num_layers, num_enc_layers):
    """Build a kernel whose refs are (x, w1, b1, ..., wN, bN, latent, recon)."""

    def kernel(*refs):
        x_ref = refs[0]
        latent_ref = refs[1 + 2 * num_layers]
        recon_ref = refs[2 + 2 * num_layers]

        h = x_ref[...]
        for li in range(num_layers):
            w_ref = refs[1 + 2 * li]
            b_ref = refs[2 + 2 * li]
            # MXU matmul with f32 accumulation; bias broadcast + ReLU on VPU.
            h = jnp.maximum(
                jnp.dot(h, w_ref[...], preferred_element_type=jnp.float32)
                + b_ref[...],
                0.0,
            )
            if li == num_enc_layers - 1:
                latent_ref[...] = h.astype(latent_ref.dtype)
        recon_ref[...] = h.astype(recon_ref.dtype)

    return kernel


# ---------------------------------------------------------------------------
# Wrapper (padding to lane-dense layouts + pallas_call plumbing)
# ---------------------------------------------------------------------------
_LANE = 128
_SUBLANE = 8


def _round_up(x, m):
    return ((x + m - 1) // m) * m


def _pad_params(params, in_dim):
    """Zero-pad each layer's (W, b) so every activation width is a multiple
    of 128 lanes.  Zero padding keeps the computation exact."""
    padded = []
    prev_p = _round_up(in_dim, _LANE)
    prev_raw = in_dim
    for w, b in params:
        din, dout = w.shape
        assert din == prev_raw, "layer dims must chain"
        dout_p = _round_up(dout, _LANE)
        w_p = jnp.zeros((prev_p, dout_p), w.dtype).at[:din, :dout].set(w)
        b_p = jnp.zeros((1, dout_p), b.dtype).at[:, :dout].set(b)
        padded.append((w_p, b_p))
        prev_p, prev_raw = dout_p, dout
    return padded


def dota2ae_forward(x, enc_params, dec_params, *, batch_tile=256):
    """Fused autoencoder forward.  Returns (latent, reconstructed)."""
    B, in_dim = x.shape
    latent_dim = enc_params[-1][0].shape[1]

    params = list(enc_params) + list(dec_params)
    num_layers = len(params)
    num_enc_layers = len(enc_params)

    params_p = _pad_params(params, in_dim)
    in_dim_p = _round_up(in_dim, _LANE)
    lat_dim_p = params_p[num_enc_layers - 1][0].shape[1]
    out_dim_p = params_p[-1][0].shape[1]

    # Pad batch: sublane multiple for the tiny path, tile multiple for the
    # batched path.
    B_p = _round_up(B, _SUBLANE)
    use_grid = B_p > batch_tile
    if use_grid:
        B_p = _round_up(B, batch_tile)

    x_p = jnp.zeros((B_p, in_dim_p), jnp.float32).at[:B, :in_dim].set(
        x.astype(jnp.float32))

    kernel = _make_fused_ae_kernel(num_layers, num_enc_layers)
    flat_inputs = [x_p]
    for w_p, b_p in params_p:
        flat_inputs.extend([w_p, b_p])

    out_shape = (
        jax.ShapeDtypeStruct((B_p, lat_dim_p), jnp.float32),
        jax.ShapeDtypeStruct((B_p, out_dim_p), jnp.float32),
    )

    if not use_grid:
        # Tiny-batch path: no grid, every operand resident whole in VMEM.
        latent_p, recon_p = pl.pallas_call(
            kernel,
            out_shape=out_shape,
            in_specs=[pl.BlockSpec(memory_space=pltpu.MemorySpace.VMEM)]
            * len(flat_inputs),
            out_specs=(
                pl.BlockSpec(memory_space=pltpu.MemorySpace.VMEM),
                pl.BlockSpec(memory_space=pltpu.MemorySpace.VMEM),
            ),
        )(*flat_inputs)
    else:
        # Batched path: tile only the batch axis; weights stay resident
        # (index_map pinned to block (0, 0) every step).
        tb = batch_tile
        grid = (B_p // tb,)
        in_specs = [pl.BlockSpec((tb, in_dim_p), lambda i: (i, 0))]
        for w_p, b_p in params_p:
            din_p, dout_p = w_p.shape
            in_specs.append(pl.BlockSpec((din_p, dout_p), lambda i: (0, 0)))
            in_specs.append(pl.BlockSpec((1, dout_p), lambda i: (0, 0)))
        out_specs = (
            pl.BlockSpec((tb, lat_dim_p), lambda i: (i, 0)),
            pl.BlockSpec((tb, out_dim_p), lambda i: (i, 0)),
        )
        latent_p, recon_p = pl.pallas_call(
            kernel,
            out_shape=out_shape,
            grid=grid,
            in_specs=in_specs,
            out_specs=out_specs,
            compiler_params=pltpu.CompilerParams(
                dimension_semantics=("parallel",)),
        )(*flat_inputs)

    latent = latent_p[:B, :latent_dim]
    reconstructed = recon_p[:B, :in_dim]
    return latent, reconstructed


dota2ae_forward_jit = jax.jit(dota2ae_forward, static_argnames=("batch_tile",))


# ---------------------------------------------------------------------------
# Parameter init (matches PyTorch nn.Linear default uniform scale)
# ---------------------------------------------------------------------------
def init_mlp_params(key, dims):
    params = []
    for i in range(len(dims) - 1):
        key, kw, kb = jax.random.split(key, 3)
        fan_in = dims[i]
        bound = 1.0 / jnp.sqrt(fan_in)
        w = jax.random.uniform(kw, (dims[i], dims[i + 1]), jnp.float32,
                               minval=-bound, maxval=bound)
        b = jax.random.uniform(kb, (1, dims[i + 1]), jnp.float32,
                               minval=-bound, maxval=bound)
        params.append((w, b))
    return key, params


def _ref_forward(x, params):
    h = x
    for w, b in params:
        h = jnp.maximum(h @ w + b, 0.0)
    return h


if __name__ == "__main__":
    # Small shapes consistent with the module's constructor arguments.
    batch = 8
    input_dim = 64
    latent_dim = 32
    encoder_layers = [48]
    decoder_layers = [48]

    key = jax.random.PRNGKey(0)
    key, kx = jax.random.split(key)
    x = jax.random.normal(kx, (batch, input_dim), jnp.float32)

    enc_dims = [input_dim] + encoder_layers + [latent_dim]
    dec_dims = [latent_dim] + decoder_layers + [input_dim]
    key, enc_params = init_mlp_params(key, enc_dims)
    key, dec_params = init_mlp_params(key, dec_dims)

    # --- tiny-batch (no-grid, fully fused) path -----------------------------
    latent, reconstructed = dota2ae_forward_jit(x, enc_params, dec_params)
    jax.block_until_ready((latent, reconstructed))

    assert latent.shape == (batch, latent_dim)
    assert reconstructed.shape == (batch, input_dim)
    assert bool(jnp.all(latent >= 0)) and bool(jnp.all(reconstructed >= 0))

    ref_latent = _ref_forward(x, enc_params)
    ref_recon = _ref_forward(ref_latent, dec_params)
    assert jnp.allclose(latent, ref_latent, atol=1e-5)
    assert jnp.allclose(reconstructed, ref_recon, atol=1e-5)

    # --- batched (grid over batch tiles, weights resident) path -------------
    key, kx2 = jax.random.split(key)
    big_batch = 512
    x_big = jax.random.normal(kx2, (big_batch, input_dim), jnp.float32)
    lat_b, rec_b = dota2ae_forward_jit(x_big, enc_params, dec_params,
                                       batch_tile=256)
    jax.block_until_ready((lat_b, rec_b))

    ref_lat_b = _ref_forward(x_big, enc_params)
    ref_rec_b = _ref_forward(ref_lat_b, dec_params)
    assert lat_b.shape == (big_batch, latent_dim)
    assert rec_b.shape == (big_batch, input_dim)
    assert jnp.allclose(lat_b, ref_lat_b, atol=1e-5)
    assert jnp.allclose(rec_b, ref_rec_b, atol=1e-5)

    print("KERNEL_OK")
</pallas_src>

<mosaic_0001>
module attributes {stable_mosaic.version = 11 : i64} {
  func.func @kernel(%arg0: memref<8x128xf32, #tpu.memory_space<vmem>>, %arg1: memref<128x128xf32, #tpu.memory_space<vmem>>, %arg2: memref<1x128xf32, #tpu.memory_space<vmem>>, %arg3: memref<128x128xf32, #tpu.memory_space<vmem>>, %arg4: memref<1x128xf32, #tpu.memory_space<vmem>>, %arg5: memref<128x128xf32, #tpu.memory_space<vmem>>, %arg6: memref<1x128xf32, #tpu.memory_space<vmem>>, %arg7: memref<128x128xf32, #tpu.memory_space<vmem>>, %arg8: memref<1x128xf32, #tpu.memory_space<vmem>>, %arg9: memref<8x128xf32, #tpu.memory_space<vmem>>, %arg10: memref<8x128xf32, #tpu.memory_space<vmem>>) attributes {dimension_semantics = [], scalar_prefetch = 0 : i64, scratch_operands = 0 : i64, tpu.core_type = #tpu.core_type<tc>} {
    %c0 = arith.constant 0 : index
    %c0_0 = arith.constant 0 : index
    %0 = vector.load %arg0[%c0, %c0_0] : memref<8x128xf32, #tpu.memory_space<vmem>>, vector<8x128xf32>
    %c0_1 = arith.constant 0 : index
    %c0_2 = arith.constant 0 : index
    %1 = vector.load %arg1[%c0_1, %c0_2] : memref<128x128xf32, #tpu.memory_space<vmem>>, vector<128x128xf32>
    %cst = arith.constant dense<0.000000e+00> : vector<8x128xf32>
    %2 = tpu.matmul %0, %1, %cst {dimension_numbers = #tpu.dot_dimension_numbers<[1], [0], [0], [1], [0, 0, 1, 1], [], []>} : vector<8x128xf32>, vector<128x128xf32>, vector<8x128xf32> -> vector<8x128xf32>
    %c0_3 = arith.constant 0 : index
    %c0_4 = arith.constant 0 : index
    %3 = vector.load %arg2[%c0_3, %c0_4] : memref<1x128xf32, #tpu.memory_space<vmem>>, vector<1x128xf32>
    %4 = vector.broadcast %3 : vector<1x128xf32> to vector<8x128xf32>
    %5 = arith.addf %2, %4 : vector<8x128xf32>
    %cst_5 = arith.constant 0.000000e+00 : f32
    %6 = vector.broadcast %cst_5 : f32 to vector<8x128xf32>
    %7 = arith.maximumf %5, %6 : vector<8x128xf32>
    %c0_6 = arith.constant 0 : index
    %c0_7 = arith.constant 0 : index
    %8 = vector.load %arg3[%c0_6, %c0_7] : memref<128x128xf32, #tpu.memory_space<vmem>>, vector<128x128xf32>
    %cst_8 = arith.constant dense<0.000000e+00> : vector<8x128xf32>
    %9 = tpu.matmul %7, %8, %cst_8 {dimension_numbers = #tpu.dot_dimension_numbers<[1], [0], [0], [1], [0, 0, 1, 1], [], []>} : vector<8x128xf32>, vector<128x128xf32>, vector<8x128xf32> -> vector<8x128xf32>
    %c0_9 = arith.constant 0 : index
    %c0_10 = arith.constant 0 : index
    %10 = vector.load %arg4[%c0_9, %c0_10] : memref<1x128xf32, #tpu.memory_space<vmem>>, vector<1x128xf32>
    %11 = vector.broadcast %10 : vector<1x128xf32> to vector<8x128xf32>
    %12 = arith.addf %9, %11 : vector<8x128xf32>
    %cst_11 = arith.constant 0.000000e+00 : f32
    %13 = vector.broadcast %cst_11 : f32 to vector<8x128xf32>
    %14 = arith.maximumf %12, %13 : vector<8x128xf32>
    %c0_12 = arith.constant 0 : index
    %c0_13 = arith.constant 0 : index
    %15 = vector.load %arg9[%c0_12, %c0_13] : memref<8x128xf32, #tpu.memory_space<vmem>>, vector<8x128xf32>
    tpu.vector_store %arg9[%c0_12, %c0_13], %14 {strides = array<i32>} : memref<8x128xf32, #tpu.memory_space<vmem>>, vector<8x128xf32>,
    %c0_14 = arith.constant 0 : index
    %c0_15 = arith.constant 0 : index
    %16 = vector.load %arg5[%c0_14, %c0_15] : memref<128x128xf32, #tpu.memory_space<vmem>>, vector<128x128xf32>
    %cst_16 = arith.constant dense<0.000000e+00> : vector<8x128xf32>
    %17 = tpu.matmul %14, %16, %cst_16 {dimension_numbers = #tpu.dot_dimension_numbers<[1], [0], [0], [1], [0, 0, 1, 1], [], []>} : vector<8x128xf32>, vector<128x128xf32>, vector<8x128xf32> -> vector<8x128xf32>
    %c0_17 = arith.constant 0 : index
    %c0_18 = arith.constant 0 : index
    %18 = vector.load %arg6[%c0_17, %c0_18] : memref<1x128xf32, #tpu.memory_space<vmem>>, vector<1x128xf32>
    %19 = vector.broadcast %18 : vector<1x128xf32> to vector<8x128xf32>
    %20 = arith.addf %17, %19 : vector<8x128xf32>
    %cst_19 = arith.constant 0.000000e+00 : f32
    %21 = vector.broadcast %cst_19 : f32 to vector<8x128xf32>
    %22 = arith.maximumf %20, %21 : vector<8x128xf32>
    %c0_20 = arith.constant 0 : index
    %c0_21 = arith.constant 0 : index
    %23 = vector.load %arg7[%c0_20, %c0_21] : memref<128x128xf32, #tpu.memory_space<vmem>>, vector<128x128xf32>
    %cst_22 = arith.constant dense<0.000000e+00> : vector<8x128xf32>
    %24 = tpu.matmul %22, %23, %cst_22 {dimension_numbers = #tpu.dot_dimension_numbers<[1], [0], [0], [1], [0, 0, 1, 1], [], []>} : vector<8x128xf32>, vector<128x128xf32>, vector<8x128xf32> -> vector<8x128xf32>
    %c0_23 = arith.constant 0 : index
    %c0_24 = arith.constant 0 : index
    %25 = vector.load %arg8[%c0_23, %c0_24] : memref<1x128xf32, #tpu.memory_space<vmem>>, vector<1x128xf32>
    %26 = vector.broadcast %25 : vector<1x128xf32> to vector<8x128xf32>
    %27 = arith.addf %24, %26 : vector<8x128xf32>
    %cst_25 = arith.constant 0.000000e+00 : f32
    %28 = vector.broadcast %cst_25 : f32 to vector<8x128xf32>
    %29 = arith.maximumf %27, %28 : vector<8x128xf32>
    %c0_26 = arith.constant 0 : index
    %c0_27 = arith.constant 0 : index
    %30 = vector.load %arg10[%c0_26, %c0_27] : memref<8x128xf32, #tpu.memory_space<vmem>>, vector<8x128xf32>
    tpu.vector_store %arg10[%c0_26, %c0_27], %29 {strides = array<i32>} : memref<8x128xf32, #tpu.memory_space<vmem>>, vector<8x128xf32>,
    return
  }
}

</mosaic_0001>

<llo_original>
// kernel: dota2ae_forward.1
$region0: #{dota2ae_forward.1}
  #allocation0 [shape = 'u32[]', space=smem, size = 0x4, offset = 0x4, fixed_abs, tag = 'smem constant byte address 0x4 - core index']
  #allocation1 [shape = 'u32[144,128]{1,0:T(1,128)}', space=vmem, size = 0x12000, scoped, tag = 'internal scratch']
  %s0 = inlined_call_operand.vmem [shape: f32[8,128], index: 0, kind: input, shape index: {}]
  %s1 = inlined_call_operand.vmem [shape: f32[128,128], index: 1, kind: input, shape index: {}]
  %s2 = inlined_call_operand.vmem [shape: f32[1,128], index: 2, kind: input, shape index: {}]
  %s3 = inlined_call_operand.vmem [shape: f32[128,128], index: 3, kind: input, shape index: {}]
  %s4 = inlined_call_operand.vmem [shape: f32[1,128], index: 4, kind: input, shape index: {}]
  %s5 = inlined_call_operand.vmem [shape: f32[128,128], index: 5, kind: input, shape index: {}]
  %s6 = inlined_call_operand.vmem [shape: f32[1,128], index: 6, kind: input, shape index: {}]
  %s7 = inlined_call_operand.vmem [shape: f32[128,128], index: 7, kind: input, shape index: {}]
  %s8 = inlined_call_operand.vmem [shape: f32[1,128], index: 8, kind: input, shape index: {}]
  %s9 = inlined_call_operand.hbm [shape: f32[8,128], index: 9, kind: output, shape index: {0}]
  %s10 = inlined_call_operand.hbm [shape: f32[8,128], index: 10, kind: output, shape index: {1}]
  %11 = xla_tuple %s9, %s10
  %s12 = sld [smem:[#allocation0]]
  $region54: #{dota2ae_forward.1} parent=0
    _
  %s14 = ssub.s32 1, %s12
  %s15 = scalar_select 0, %s14, %s12
  $region1: #{dota2ae_forward.1} parent=0
    #allocation2 [shape = 'u8[4096]{0}', space=vmem, size = 0x1000, scoped, tag = 'output window, operand 0, single buffered']
    #allocation3 [shape = 's32[1]{0}', space=sflag, size = 0x4, scoped, tag = 'scoped memory for dota2ae_forward.1']
    #allocation4 [shape = 'u8[4096]{0}', space=vmem, size = 0x1000, scoped, tag = 'output window, operand 1, single buffered']
    #allocation5 [shape = 's32[1]{0}', space=sflag, size = 0x4, scoped, tag = 'scoped memory for dota2ae_forward.1']
    %16 = vsyncpa [#allocation3], 0
    %17 = vsyncpa [#allocation5], 0
    // Predicated region
    $region2: #{dota2ae_forward.1} parent=1 // pred_check
      _
    $region3: #{dota2ae_forward.1} parent=1 // pred_check_branch
      %19 = sbr.rel (0) target = $region5
    $region4: #{dota2ae_forward.1} parent=1 // pred_region
      _
    $region5: #{dota2ae_forward.1} parent=1 // pred_fallthru
      _
    // Predicated region
    $region6: #{dota2ae_forward.1} parent=1 // pred_check
      _
    $region7: #{dota2ae_forward.1} parent=1 // pred_check_branch
      %21 = sbr.rel (0) target = $region9
    $region8: #{dota2ae_forward.1} parent=1 // pred_region
      _
    $region9: #{dota2ae_forward.1} parent=1 // pred_fallthru
      _
    // Predicated region
    $region10: #{dota2ae_forward.1} parent=1 // pred_check
      _
    $region11: #{dota2ae_forward.1} parent=1 // pred_check_branch
      %23 = sbr.rel (0) target = $region13
    $region12: #{dota2ae_forward.1} parent=1 // pred_region
      _
    $region13: #{dota2ae_forward.1} parent=1 // pred_fallthru
      _
    // Predicated region
    $region14: #{dota2ae_forward.1} parent=1 // pred_check
      _
    $region15: #{dota2ae_forward.1} parent=1 // pred_check_branch
      %25 = sbr.rel (0) target = $region17
    $region16: #{dota2ae_forward.1} parent=1 // pred_region
      _
    $region17: #{dota2ae_forward.1} parent=1 // pred_fallthru
      _
    // Predicated region
    $region18: #{dota2ae_forward.1} parent=1 // pred_check
      _
    $region19: #{dota2ae_forward.1} parent=1 // pred_check_branch
      %27 = sbr.rel (0) target = $region21
    $region20: #{dota2ae_forward.1} parent=1 // pred_region
      _
    $region21: #{dota2ae_forward.1} parent=1 // pred_fallthru
      _
    // Predicated region
    $region22: #{dota2ae_forward.1} parent=1 // pred_check
      _
    $region23: #{dota2ae_forward.1} parent=1 // pred_check_branch
      %29 = sbr.rel (0) target = $region25
    $region24: #{dota2ae_forward.1} parent=1 // pred_region
      _
    $region25: #{dota2ae_forward.1} parent=1 // pred_fallthru
      _
    // Predicated region
    $region26: #{dota2ae_forward.1} parent=1 // pred_check
      _
    $region27: #{dota2ae_forward.1} parent=1 // pred_check_branch
      %31 = sbr.rel (0) target = $region29
    $region28: #{dota2ae_forward.1} parent=1 // pred_region
      _
    $region29: #{dota2ae_forward.1} parent=1 // pred_fallthru
      _
    // Predicated region
    $region30: #{dota2ae_forward.1} parent=1 // pred_check
      _
    $region31: #{dota2ae_forward.1} parent=1 // pred_check_branch
      %33 = sbr.rel (0) target = $region33
    $region32: #{dota2ae_forward.1} parent=1 // pred_region
      _
    $region33: #{dota2ae_forward.1} parent=1 // pred_fallthru
      _
    // Predicated region
    $region34: #{dota2ae_forward.1} parent=1 // pred_check
      _
    $region35: #{dota2ae_forward.1} parent=1 // pred_check_branch
      %35 = sbr.rel (0) target = $region37
    $region36: #{dota2ae_forward.1} parent=1 // pred_region
      _
    $region37: #{dota2ae_forward.1} parent=1 // pred_fallthru
      _
    %v36 = vld [vmem:[%s0] sm:$0xff]
    %v37 = vld [vmem:[%s1] sm:$0xff]
    %v38 = vld [vmem:[%s1 + $0x8] sm:$0xff]
    %v39 = vld [vmem:[%s1 + $0x10] sm:$0xff]
    %v40 = vld [vmem:[%s1 + $0x18] sm:$0xff]
    %v41 = vld [vmem:[%s1 + $0x20] sm:$0xff]
    %v42 = vld [vmem:[%s1 + $0x28] sm:$0xff]
    %v43 = vld [vmem:[%s1 + $0x30] sm:$0xff]
    %v44 = vld [vmem:[%s1 + $0x38] sm:$0xff]
    %v45 = vld [vmem:[%s1 + $0x40] sm:$0xff]
    %v46 = vld [vmem:[%s1 + $0x48] sm:$0xff]
    %v47 = vld [vmem:[%s1 + $0x50] sm:$0xff]
    %v48 = vld [vmem:[%s1 + $0x58] sm:$0xff]
    %v49 = vld [vmem:[%s1 + $0x60] sm:$0xff]
    %v50 = vld [vmem:[%s1 + $0x68] sm:$0xff]
    %v51 = vld [vmem:[%s1 + $0x70] sm:$0xff]
    %v52 = vld [vmem:[%s1 + $0x78] sm:$0xff]
    %v53 = vld [vmem:[%s2] sm:$0x1]
    %v55 = vlaneseq
    %v56 = vshrl.u32 %v55, 7
    %v57 = vsub.s32 0, %v56
    %v58 = vrot.slane %v53, %v57
    %60 = vmatprep.subr.mxu0 0.0
    %61 = vmatpush1.msra.mxu0 %v37
    %62 = vmatprep.subr.mxu0 0.0
    %63 = vmatpush1.msra.mxu0 %v38
    %64 = vmatprep.subr.mxu0 0.0
    %65 = vmatpush1.msra.mxu0 %v39
    %66 = vmatprep.subr.mxu0 0.0
    %67 = vmatpush1.msra.mxu0 %v40
    %68 = vmatprep.subr.mxu0 0.0
    %69 = vmatpush1.msra.mxu0 %v41
    %70 = vmatprep.subr.mxu0 0.0
    %71 = vmatpush1.msra.mxu0 %v42
    %72 = vmatprep.subr.mxu0 0.0
    %73 = vmatpush1.msra.mxu0 %v43
    %74 = vmatprep.subr.mxu0 0.0
    %75 = vmatpush1.msra.mxu0 %v44
    %76 = vmatprep.subr.mxu0 0.0
    %77 = vmatpush1.msra.mxu0 %v45
    %78 = vmatprep.subr.mxu0 0.0
    %79 = vmatpush1.msra.mxu0 %v46
    %80 = vmatprep.subr.mxu0 0.0
    %81 = vmatpush1.msra.mxu0 %v47
    %82 = vmatprep.subr.mxu0 0.0
    %83 = vmatpush1.msra.mxu0 %v48
    %84 = vmatprep.subr.mxu0 0.0
    %85 = vmatpush1.msra.mxu0 %v49
    %86 = vmatprep.subr.mxu0 0.0
    %87 = vmatpush1.msra.mxu0 %v50
    %88 = vmatprep.subr.mxu0 0.0
    %89 = vmatpush1.msra.mxu0 %v51
    %90 = vmatprep.subr.mxu0 0.0
    %91 = vmatpush1.msra.mxu0 %v52
    %92 = vmatprep.subr.mxu0 0.0
    %93 = vmatpush1.msra.mxu0 0.0
    %94 = vmatprep.subr.mxu0 0.0
    %95 = vmatpush1.msra.mxu0 0.0
    %96 = vmatprep.subr.mxu0 0.0
    %97 = vmatpush1.msra.mxu0 0.0
    %98 = vmatprep.subr.mxu0 0.0
    %99 = vmatpush1.msra.mxu0 0.0
    %100 = vmatprep.subr.mxu0 0.0
    %101 = vmatpush1.msra.mxu0 0.0
    %102 = vmatprep.subr.mxu0 0.0
    %103 = vmatpush1.msra.mxu0 0.0
    %104 = vmatprep.subr.mxu0 0.0
    %105 = vmatpush1.msra.mxu0 0.0
    %106 = vmatprep.subr.mxu0 0.0
    %107 = vmatpush1.msra.mxu0 0.0
    %108 = vmatprep.subr.mxu0 0.0
    %109 = vmatpush1.msra.mxu0 0.0
    %110 = vmatprep.subr.mxu0 0.0
    %111 = vmatpush1.msra.mxu0 0.0
    %112 = vmatprep.subr.mxu0 0.0
    %113 = vmatpush1.msra.mxu0 0.0
    %114 = vmatprep.subr.mxu0 0.0
    %115 = vmatpush1.msra.mxu0 0.0
    %116 = vmatprep.subr.mxu0 0.0
    %117 = vmatpush1.msra.mxu0 0.0
    %118 = vmatprep.subr.mxu0 0.0
    %119 = vmatpush1.msra.mxu0 0.0
    %120 = vmatprep.subr.mxu0 0.0
    %121 = vmatpush1.msra.mxu0 0.0
    %122 = vmatprep.subr.mxu0 0.0
    %123 = vmatpush1.msra.mxu0 0.0
    %124 = vmatprep.mubr.f32.mxu0 0.0
    %125 = vmatmul.mubr.f32.gmra.mrb[0].mxu0 %v36
    %v126 = vpop.f32.mrb[0].mxu0
    %v127 = vadd.f32 %v58, %v126
    %v128 = vpop.f32.mrb[0].mxu0
    %129 = vdwg.mxu0
    %v130 = vmax.f32 %v127, 0.0
    %v131 = vld [vmem:[%s3] sm:$0xff]
    %v132 = vld [vmem:[%s3 + $0x8] sm:$0xff]
    %v133 = vld [vmem:[%s3 + $0x10] sm:$0xff]
    %v134 = vld [vmem:[%s3 + $0x18] sm:$0xff]
    %v135 = vld [vmem:[%s3 + $0x20] sm:$0xff]
    %v136 = vld [vmem:[%s3 + $0x28] sm:$0xff]
    %v137 = vld [vmem:[%s3 + $0x30] sm:$0xff]
    %v138 = vld [vmem:[%s3 + $0x38] sm:$0xff]
    %v139 = vld [vmem:[%s3 + $0x40] sm:$0xff]
    %v140 = vld [vmem:[%s3 + $0x48] sm:$0xff]
    %v141 = vld [vmem:[%s3 + $0x50] sm:$0xff]
    %v142 = vld [vmem:[%s3 + $0x58] sm:$0xff]
    %v143 = vld [vmem:[%s3 + $0x60] sm:$0xff]
    %v144 = vld [vmem:[%s3 + $0x68] sm:$0xff]
    %v145 = vld [vmem:[%s3 + $0x70] sm:$0xff]
    %v146 = vld [vmem:[%s3 + $0x78] sm:$0xff]
    %v147 = vld [vmem:[%s4] sm:$0x1]
    %v149 = vlaneseq
    %v150 = vshrl.u32 %v149, 7
    %v151 = vsub.s32 0, %v150
    %v152 = vrot.slane %v147, %v151
    %154 = vmatprep.subr.mxu0 0.0
    %155 = vmatpush1.msra.mxu0 %v131
    %156 = vmatprep.subr.mxu0 0.0
    %157 = vmatpush1.msra.mxu0 %v132
    %158 = vmatprep.subr.mxu0 0.0
    %159 = vmatpush1.msra.mxu0 %v133
    %160 = vmatprep.subr.mxu0 0.0
    %161 = vmatpush1.msra.mxu0 %v134
    %162 = vmatprep.subr.mxu0 0.0
    %163 = vmatpush1.msra.mxu0 %v135
    %164 = vmatprep.subr.mxu0 0.0
    %165 = vmatpush1.msra.mxu0 %v136
    %166 = vmatprep.subr.mxu0 0.0
    %167 = vmatpush1.msra.mxu0 %v137
    %168 = vmatprep.subr.mxu0 0.0
    %169 = vmatpush1.msra.mxu0 %v138
    %170 = vmatprep.subr.mxu0 0.0
    %171 = vmatpush1.msra.mxu0 %v139
    %172 = vmatprep.subr.mxu0 0.0
    %173 = vmatpush1.msra.mxu0 %v140
    %174 = vmatprep.subr.mxu0 0.0
    %175 = vmatpush1.msra.mxu0 %v141
    %176 = vmatprep.subr.mxu0 0.0
    %177 = vmatpush1.msra.mxu0 %v142
    %178 = vmatprep.subr.mxu0 0.0
    %179 = vmatpush1.msra.mxu0 %v143
    %180 = vmatprep.subr.mxu0 0.0
    %181 = vmatpush1.msra.mxu0 %v144
    %182 = vmatprep.subr.mxu0 0.0
    %183 = vmatpush1.msra.mxu0 %v145
    %184 = vmatprep.subr.mxu0 0.0
    %185 = vmatpush1.msra.mxu0 %v146
    %186 = vmatprep.subr.mxu0 0.0
    %187 = vmatpush1.msra.mxu0 0.0
    %188 = vmatprep.subr.mxu0 0.0
    %189 = vmatpush1.msra.mxu0 0.0
    %190 = vmatprep.subr.mxu0 0.0
    %191 = vmatpush1.msra.mxu0 0.0
    %192 = vmatprep.subr.mxu0 0.0
    %193 = vmatpush1.msra.mxu0 0.0
    %194 = vmatprep.subr.mxu0 0.0
    %195 = vmatpush1.msra.mxu0 0.0
    %196 = vmatprep.subr.mxu0 0.0
    %197 = vmatpush1.msra.mxu0 0.0
    %198 = vmatprep.subr.mxu0 0.0
    %199 = vmatpush1.msra.mxu0 0.0
    %200 = vmatprep.subr.mxu0 0.0
    %201 = vmatpush1.msra.mxu0 0.0
    %202 = vmatprep.subr.mxu0 0.0
    %203 = vmatpush1.msra.mxu0 0.0
    %204 = vmatprep.subr.mxu0 0.0
    %205 = vmatpush1.msra.mxu0 0.0
    %206 = vmatprep.subr.mxu0 0.0
    %207 = vmatpush1.msra.mxu0 0.0
    %208 = vmatprep.subr.mxu0 0.0
    %209 = vmatpush1.msra.mxu0 0.0
    %210 = vmatprep.subr.mxu0 0.0
    %211 = vmatpush1.msra.mxu0 0.0
    %212 = vmatprep.subr.mxu0 0.0
    %213 = vmatpush1.msra.mxu0 0.0
    %214 = vmatprep.subr.mxu0 0.0
    %215 = vmatpush1.msra.mxu0 0.0
    %216 = vmatprep.subr.mxu0 0.0
    %217 = vmatpush1.msra.mxu0 0.0
    %218 = vmatprep.mubr.f32.mxu0 0.0
    %219 = vmatmul.mubr.f32.gmra.mrb[0].mxu0 %v130
    %v220 = vpop.f32.mrb[0].mxu0
    %v221 = vadd.f32 %v152, %v220
    %v222 = vpop.f32.mrb[0].mxu0
    %223 = vdwg.mxu0
    %v224 = vmax.f32 %v221, 0.0
    %225 = vst [vmem:[#allocation2] sm:$0xff] %v224
    %v226 = vld [vmem:[%s5] sm:$0xff]
    %v227 = vld [vmem:[%s5 + $0x8] sm:$0xff]
    %v228 = vld [vmem:[%s5 + $0x10] sm:$0xff]
    %v229 = vld [vmem:[%s5 + $0x18] sm:$0xff]
    %v230 = vld [vmem:[%s5 + $0x20] sm:$0xff]
    %v231 = vld [vmem:[%s5 + $0x28] sm:$0xff]
    %v232 = vld [vmem:[%s5 + $0x30] sm:$0xff]
    %v233 = vld [vmem:[%s5 + $0x38] sm:$0xff]
    %v234 = vld [vmem:[%s5 + $0x40] sm:$0xff]
    %v235 = vld [vmem:[%s5 + $0x48] sm:$0xff]
    %v236 = vld [vmem:[%s5 + $0x50] sm:$0xff]
    %v237 = vld [vmem:[%s5 + $0x58] sm:$0xff]
    %v238 = vld [vmem:[%s5 + $0x60] sm:$0xff]
    %v239 = vld [vmem:[%s5 + $0x68] sm:$0xff]
    %v240 = vld [vmem:[%s5 + $0x70] sm:$0xff]
    %v241 = vld [vmem:[%s5 + $0x78] sm:$0xff]
    %v242 = vld [vmem:[%s6] sm:$0x1]
    %v244 = vlaneseq
    %v245 = vshrl.u32 %v244, 7
    %v246 = vsub.s32 0, %v245
    %v247 = vrot.slane %v242, %v246
    %249 = vmatprep.subr.mxu0 0.0
    %250 = vmatpush1.msra.mxu0 %v226
    %251 = vmatprep.subr.mxu0 0.0
    %252 = vmatpush1.msra.mxu0 %v227
    %253 = vmatprep.subr.mxu0 0.0
    %254 = vmatpush1.msra.mxu0 %v228
    %255 = vmatprep.subr.mxu0 0.0
    %256 = vmatpush1.msra.mxu0 %v229
    %257 = vmatprep.subr.mxu0 0.0
    %258 = vmatpush1.msra.mxu0 %v230
    %259 = vmatprep.subr.mxu0 0.0
    %260 = vmatpush1.msra.mxu0 %v231
    %261 = vmatprep.subr.mxu0 0.0
    %262 = vmatpush1.msra.mxu0 %v232
    %263 = vmatprep.subr.mxu0 0.0
    %264 = vmatpush1.msra.mxu0 %v233
    %265 = vmatprep.subr.mxu0 0.0
    %266 = vmatpush1.msra.mxu0 %v234
    %267 = vmatprep.subr.mxu0 0.0
    %268 = vmatpush1.msra.mxu0 %v235
    %269 = vmatprep.subr.mxu0 0.0
    %270 = vmatpush1.msra.mxu0 %v236
    %271 = vmatprep.subr.mxu0 0.0
    %272 = vmatpush1.msra.mxu0 %v237
    %273 = vmatprep.subr.mxu0 0.0
    %274 = vmatpush1.msra.mxu0 %v238
    %275 = vmatprep.subr.mxu0 0.0
    %276 = vmatpush1.msra.mxu0 %v239
    %277 = vmatprep.subr.mxu0 0.0
    %278 = vmatpush1.msra.mxu0 %v240
    %279 = vmatprep.subr.mxu0 0.0
    %280 = vmatpush1.msra.mxu0 %v241
    %281 = vmatprep.subr.mxu0 0.0
    %282 = vmatpush1.msra.mxu0 0.0
    %283 = vmatprep.subr.mxu0 0.0
    %284 = vmatpush1.msra.mxu0 0.0
    %285 = vmatprep.subr.mxu0 0.0
    %286 = vmatpush1.msra.mxu0 0.0
    %287 = vmatprep.subr.mxu0 0.0
    %288 = vmatpush1.msra.mxu0 0.0
    %289 = vmatprep.subr.mxu0 0.0
    %290 = vmatpush1.msra.mxu0 0.0
    %291 = vmatprep.subr.mxu0 0.0
    %292 = vmatpush1.msra.mxu0 0.0
    %293 = vmatprep.subr.mxu0 0.0
    %294 = vmatpush1.msra.mxu0 0.0
    %295 = vmatprep.subr.mxu0 0.0
    %296 = vmatpush1.msra.mxu0 0.0
    %297 = vmatprep.subr.mxu0 0.0
    %298 = vmatpush1.msra.mxu0 0.0
    %299 = vmatprep.subr.mxu0 0.0
    %300 = vmatpush1.msra.mxu0 0.0
    %301 = vmatprep.subr.mxu0 0.0
    %302 = vmatpush1.msra.mxu0 0.0
    %303 = vmatprep.subr.mxu0 0.0
    %304 = vmatpush1.msra.mxu0 0.0
    %305 = vmatprep.subr.mxu0 0.0
    %306 = vmatpush1.msra.mxu0 0.0
    %307 = vmatprep.subr.mxu0 0.0
    %308 = vmatpush1.msra.mxu0 0.0
    %309 = vmatprep.subr.mxu0 0.0
    %310 = vmatpush1.msra.mxu0 0.0
    %311 = vmatprep.subr.mxu0 0.0
    %312 = vmatpush1.msra.mxu0 0.0
    %313 = vmatprep.mubr.f32.mxu0 0.0
    %314 = vmatmul.mubr.f32.gmra.mrb[0].mxu0 %v224
    %v315 = vpop.f32.mrb[0].mxu0
    %v316 = vadd.f32 %v247, %v315
    %v317 = vpop.f32.mrb[0].mxu0
    %318 = vdwg.mxu0
    %v319 = vmax.f32 %v316, 0.0
    %v320 = vld [vmem:[%s7] sm:$0xff]
    %v321 = vld [vmem:[%s7 + $0x8] sm:$0xff]
    %v322 = vld [vmem:[%s7 + $0x10] sm:$0xff]
    %v323 = vld [vmem:[%s7 + $0x18] sm:$0xff]
    %v324 = vld [vmem:[%s7 + $0x20] sm:$0xff]
    %v325 = vld [vmem:[%s7 + $0x28] sm:$0xff]
    %v326 = vld [vmem:[%s7 + $0x30] sm:$0xff]
    %v327 = vld [vmem:[%s7 + $0x38] sm:$0xff]
    %v328 = vld [vmem:[%s7 + $0x40] sm:$0xff]
    %v329 = vld [vmem:[%s7 + $0x48] sm:$0xff]
    %v330 = vld [vmem:[%s7 + $0x50] sm:$0xff]
    %v331 = vld [vmem:[%s7 + $0x58] sm:$0xff]
    %v332 = vld [vmem:[%s7 + $0x60] sm:$0xff]
    %v333 = vld [vmem:[%s7 + $0x68] sm:$0xff]
    %v334 = vld [vmem:[%s7 + $0x70] sm:$0xff]
    %v335 = vld [vmem:[%s7 + $0x78] sm:$0xff]
    %v336 = vld [vmem:[%s8] sm:$0x1]
    %v338 = vlaneseq
    %v339 = vshrl.u32 %v338, 7
    %v340 = vsub.s32 0, %v339
    %v341 = vrot.slane %v336, %v340
    %343 = vmatprep.subr.mxu0 0.0
    %344 = vmatpush1.msra.mxu0 %v320
    %345 = vmatprep.subr.mxu0 0.0
    %346 = vmatpush1.msra.mxu0 %v321
    %347 = vmatprep.subr.mxu0 0.0
    %348 = vmatpush1.msra.mxu0 %v322
    %349 = vmatprep.subr.mxu0 0.0
    %350 = vmatpush1.msra.mxu0 %v323
    %351 = vmatprep.subr.mxu0 0.0
    %352 = vmatpush1.msra.mxu0 %v324
    %353 = vmatprep.subr.mxu0 0.0
    %354 = vmatpush1.msra.mxu0 %v325
    %355 = vmatprep.subr.mxu0 0.0
    %356 = vmatpush1.msra.mxu0 %v326
    %357 = vmatprep.subr.mxu0 0.0
    %358 = vmatpush1.msra.mxu0 %v327
    %359 = vmatprep.subr.mxu0 0.0
    %360 = vmatpush1.msra.mxu0 %v328
    %361 = vmatprep.subr.mxu0 0.0
    %362 = vmatpush1.msra.mxu0 %v329
    %363 = vmatprep.subr.mxu0 0.0
    %364 = vmatpush1.msra.mxu0 %v330
    %365 = vmatprep.subr.mxu0 0.0
    %366 = vmatpush1.msra.mxu0 %v331
    %367 = vmatprep.subr.mxu0 0.0
    %368 = vmatpush1.msra.mxu0 %v332
    %369 = vmatprep.subr.mxu0 0.0
    %370 = vmatpush1.msra.mxu0 %v333
    %371 = vmatprep.subr.mxu0 0.0
    %372 = vmatpush1.msra.mxu0 %v334
    %373 = vmatprep.subr.mxu0 0.0
    %374 = vmatpush1.msra.mxu0 %v335
    %375 = vmatprep.subr.mxu0 0.0
    %376 = vmatpush1.msra.mxu0 0.0
    %377 = vmatprep.subr.mxu0 0.0
    %378 = vmatpush1.msra.mxu0 0.0
    %379 = vmatprep.subr.mxu0 0.0
    %380 = vmatpush1.msra.mxu0 0.0
    %381 = vmatprep.subr.mxu0 0.0
    %382 = vmatpush1.msra.mxu0 0.0
    %383 = vmatprep.subr.mxu0 0.0
    %384 = vmatpush1.msra.mxu0 0.0
    %385 = vmatprep.subr.mxu0 0.0
    %386 = vmatpush1.msra.mxu0 0.0
    %387 = vmatprep.subr.mxu0 0.0
    %388 = vmatpush1.msra.mxu0 0.0
    %389 = vmatprep.subr.mxu0 0.0
    %390 = vmatpush1.msra.mxu0 0.0
    %391 = vmatprep.subr.mxu0 0.0
    %392 = vmatpush1.msra.mxu0 0.0
    %393 = vmatprep.subr.mxu0 0.0
    %394 = vmatpush1.msra.mxu0 0.0
    %395 = vmatprep.subr.mxu0 0.0
    %396 = vmatpush1.msra.mxu0 0.0
    %397 = vmatprep.subr.mxu0 0.0
    %398 = vmatpush1.msra.mxu0 0.0
    %399 = vmatprep.subr.mxu0 0.0
    %400 = vmatpush1.msra.mxu0 0.0
    %401 = vmatprep.subr.mxu0 0.0
    %402 = vmatpush1.msra.mxu0 0.0
    %403 = vmatprep.subr.mxu0 0.0
    %404 = vmatpush1.msra.mxu0 0.0
    %405 = vmatprep.subr.mxu0 0.0
    %406 = vmatpush1.msra.mxu0 0.0
    %407 = vmatprep.mubr.f32.mxu0 0.0
    %408 = vmatmul.mubr.f32.gmra.mrb[0].mxu0 %v319
    %v409 = vpop.f32.mrb[0].mxu0
    %v410 = vadd.f32 %v341, %v409
    %v411 = vpop.f32.mrb[0].mxu0
    %412 = vdwg.mxu0
    %v413 = vmax.f32 %v410, 0.0
    %414 = vst [vmem:[#allocation4] sm:$0xff] %v413
    // Predicated region
    $region38: #{dota2ae_forward.1} parent=1 // pred_check
      _
    $region39: #{dota2ae_forward.1} parent=1 // pred_check_branch
      %416 = sbr.rel (0) target = $region41
    $region40: #{dota2ae_forward.1} parent=1 // pred_region
      %s418 = ssub.s32 128, 128
      %419 = vsyncadd [#allocation3], %s418
      %s421 = sshll.u32 [#allocation2], 4
      %s422 = int_to_ptr.vmem [resolvable:$true] %s421
      %424 = dma.vmem_to_hbm [thread:$0]  %s422, 128, %s9, [#allocation3]
    $region41: #{dota2ae_forward.1} parent=1 // pred_fallthru
      _
    // Predicated region
    $region42: #{dota2ae_forward.1} parent=1 // pred_check
      _
    $region43: #{dota2ae_forward.1} parent=1 // pred_check_branch
      %426 = sbr.rel (0) target = $region45
    $region44: #{dota2ae_forward.1} parent=1 // pred_region
      %s428 = ssub.s32 128, 128
      %429 = vsyncadd [#allocation5], %s428
      %s431 = sshll.u32 [#allocation4], 4
      %s432 = int_to_ptr.vmem [resolvable:$true] %s431
      %434 = dma.vmem_to_hbm [thread:$0]  %s432, 128, %s10, [#allocation5]
    $region45: #{dota2ae_forward.1} parent=1 // pred_fallthru
      _
    // Predicated region
    $region46: #{dota2ae_forward.1} parent=1 // pred_check
      _
    $region47: #{dota2ae_forward.1} parent=1 // pred_check_branch
      %436 = sbr.rel (0) target = $region49
    $region48: #{dota2ae_forward.1} parent=1 // pred_region
      %437 = dma.done [#allocation3], 128
    $region49: #{dota2ae_forward.1} parent=1 // pred_fallthru
      _
    // Predicated region
    $region50: #{dota2ae_forward.1} parent=1 // pred_check
      _
    $region51: #{dota2ae_forward.1} parent=1 // pred_check_branch
      %439 = sbr.rel (0) target = $region53
    $region52: #{dota2ae_forward.1} parent=1 // pred_region
      %440 = dma.done [#allocation5], 128
    $region53: #{dota2ae_forward.1} parent=1 // pred_fallthru
      _
    %441 = vsyncpa [#allocation3], 1
    %442 = vsyncpa [#allocation5], 1

</llo_original>
